<compile_context>
chip_gen: v7x
topology: tpu7x:2x2x1
jax: 0.10.0
libtpu: 0.0.40
codegen_flags: <defaults>
</compile_context>

<pallas_src>
import jax
import jax.numpy as jnp
from jax.experimental import pallas as pl
from jax.experimental.pallas import tpu as pltpu

_EPS = 1e-12            # F.normalize default eps
_EPS_SQ = _EPS * _EPS   # max(||v||, eps)^2 == max(||v||^2, eps^2) for ||v|| >= 0


def _map_corr_mse_kernel(x_ref, y_ref, o_ref):
    # x_ref / y_ref: (Bt, N, D) in native (or requested compute) dtype.
    x = x_ref[...]
    y = y_ref[...]

    # Transpose to (Bt, D, N) so the grams contract over the LAST dim (the
    # canonical flash-style 'bdn,ben->bde' MXU pattern).  The XLU transpose is
    # cheap and off the VALU/MXU critical path; the N x N maps are never built.
    xt = jnp.swapaxes(x, 1, 2)
    yt = jnp.swapaxes(y, 1, 2)

    gx = jnp.einsum("bdn,ben->bde", xt, xt, preferred_element_type=jnp.float32)
    gy = jnp.einsum("bdn,ben->bde", yt, yt, preferred_element_type=jnp.float32)
    gxy = jnp.einsum("bdn,ben->bde", xt, yt, preferred_element_type=jnp.float32)

    # Frobenius identities:
    #   ||corr_x||^2 = ||X^T X||_F^2,   ||corr_y||^2 = ||Y^T Y||_F^2,
    #   <corr_x, corr_y> = ||X^T Y||_F^2.
    nx2 = jnp.sum(gx * gx, axis=(1, 2), keepdims=True)    # (Bt, 1, 1)
    ny2 = jnp.sum(gy * gy, axis=(1, 2), keepdims=True)
    dot = jnp.sum(gxy * gxy, axis=(1, 2), keepdims=True)

    nx2c = jnp.maximum(nx2, _EPS_SQ)     # max(||corr_x||, eps)^2
    ny2c = jnp.maximum(ny2, _EPS_SQ)
    inv_nx = jax.lax.rsqrt(nx2c)         # EUP
    inv_ny = jax.lax.rsqrt(ny2c)

    # ||cx_hat||^2 + ||cy_hat||^2 - 2<cx_hat, cy_hat>  ==  sum((cx_hat-cy_hat)^2)
    per_b = nx2 / nx2c + ny2 / ny2c - 2.0 * dot * (inv_nx * inv_ny)
    step_loss = jnp.sum(per_b)

    # Lane-dense (1, 8, 128) output tile: every lane holds the step loss, so
    # the wrapper reduces with a plain dense sum (no strided gather).
    o_ref[...] = jnp.full(o_ref.shape, step_loss, dtype=jnp.float32)


def _round_up(v, m):
    return (v + m - 1) // m * m


def _default_vmem_limit_bytes():
    """Generation-aware scoped-VMEM request: ~3/4 of physical, capped at 96 MiB."""
    try:
        cap = int(pltpu.get_tpu_info().vmem_capacity_bytes)
    except Exception:
        cap = 64 * 1024 * 1024   # assume the smallest (v7x per-core VMEM)
    return int(min(96 * 1024 * 1024, (3 * cap) // 4))


def _per_batch_vmem_bytes(N, D, in_itemsize):
    """Conservative per-batch-element footprint, with (8, 128) layout padding."""
    n8, n128 = _round_up(N, 8), _round_up(N, 128)
    d8, d128 = _round_up(D, 8), _round_up(D, 128)
    xy_blocks = 2 * 2 * n8 * d128 * in_itemsize   # double-buffered x & y blocks
    xt_yt = 2 * d8 * n128 * in_itemsize           # in-kernel transposed copies
    grams = 6 * d8 * d128 * 4                     # gx/gy/gxy + their squares (f32)
    return xy_blocks + xt_yt + grams


def _pick_block_b(B, N, D, in_itemsize, vmem_limit_bytes):
    # ~75% of the requested scoped VMEM, minus the double-buffered output tile
    # and ~1 MiB of compiler-internal scratch headroom.
    budget = (3 * vmem_limit_bytes) // 4 - 2 * 8 * 128 * 4 - (1 << 20)
    fit = max(1, budget // max(_per_batch_vmem_bytes(N, D, in_itemsize), 1))
    # Keep >= min(B, 4) grid steps: >=2 feeds both v7x TensorCores (the grid
    # axis is "parallel"), >=3-4 lets the auto-pipeline overlap DMA & compute.
    cap = max(1, B // min(B, 4))
    bt = int(max(1, min(B, fit, cap)))
    while B % bt:        # keep a clean divisor of B
        bt -= 1
    return bt


def map_correlation_mse(x, y, reduction="sum", block_b=None, compute_dtype=None,
                        vmem_limit_bytes=None):
    """x, y: (B, N, D) feature maps.  Returns the scalar loss ('sum' or 'mean')."""
    B, N, D = x.shape
    assert y.shape == (B, N, D)
    if reduction not in ("sum", "mean"):
        # TODO(synk): reduction='none' would need a (B, N*N) per-element output;
        # only the module default ('sum') and 'mean' are implemented.
        raise NotImplementedError(f"reduction={reduction!r} is not supported")

    if compute_dtype is not None:
        # Optional bf16 path: halves HBM/VMEM traffic, ~2x MXU rate on v6e/v7x.
        # Off by default since it drifts slightly from the f32 reference.
        x = x.astype(compute_dtype)
        y = y.astype(compute_dtype)

    if vmem_limit_bytes is None:
        vmem_limit_bytes = _default_vmem_limit_bytes()
    if block_b is None:
        block_b = _pick_block_b(B, N, D, jnp.dtype(x.dtype).itemsize,
                                vmem_limit_bytes)
    assert B % block_b == 0, (B, block_b)
    grid_b = B // block_b

    partials = pl.pallas_call(
        _map_corr_mse_kernel,
        out_shape=jax.ShapeDtypeStruct((grid_b, 8, 128), jnp.float32),
        grid_spec=pltpu.PrefetchScalarGridSpec(
            num_scalar_prefetch=0,
            grid=(grid_b,),
            in_specs=[
                pl.BlockSpec((block_b, N, D), lambda g: (g, 0, 0)),
                pl.BlockSpec((block_b, N, D), lambda g: (g, 0, 0)),
            ],
            out_specs=pl.BlockSpec((1, 8, 128), lambda g: (g, 0, 0)),
        ),
        compiler_params=pltpu.CompilerParams(
            dimension_semantics=("parallel",),   # independent per-step outputs
            vmem_limit_bytes=int(vmem_limit_bytes),
        ),
    )(x, y)

    # Every step tile holds its step loss replicated across all 8*128 lanes,
    # so a dense sum over the whole array divided by 1024 recovers the total.
    loss = jnp.sum(partials) * (1.0 / (8 * 128))
    if reduction == "mean":
        loss = loss / jnp.float32(B * N * N)
    return loss


def _reference(x, y, reduction="sum"):
    xf = x.astype(jnp.float32)
    yf = y.astype(jnp.float32)
    cx = jnp.einsum("bnd,bmd->bnm", xf, xf).reshape(x.shape[0], -1)
    cy = jnp.einsum("bnd,bmd->bnm", yf, yf).reshape(y.shape[0], -1)
    cx = cx / jnp.maximum(jnp.linalg.norm(cx, axis=1, keepdims=True), _EPS)
    cy = cy / jnp.maximum(jnp.linalg.norm(cy, axis=1, keepdims=True), _EPS)
    loss = jnp.sum((cx - cy) ** 2)
    if reduction == "mean":
        loss = loss / (cx.shape[0] * cx.shape[1])
    return loss


if __name__ == "__main__":
    key = jax.random.PRNGKey(0)
    kx, ky = jax.random.split(key)
    B, N, D = 4, 16, 32  # batch, tokens (feature-map rows), hidden dim
    x = jax.random.normal(kx, (B, N, D), dtype=jnp.float32)
    y = jax.random.normal(ky, (B, N, D), dtype=jnp.float32)

    ref = _reference(x, y)

    # Auto block size (grid_b >= min(B, 4) -> pipelined / megacore-friendly).
    loss = map_correlation_mse(x, y, reduction="sum")
    jax.block_until_ready(loss)
    assert jnp.allclose(loss, ref, rtol=1e-4, atol=1e-5), (loss, ref)

    # Explicit multi-element block (2 batch elements per grid step).
    loss2 = map_correlation_mse(x, y, reduction="sum", block_b=2)
    jax.block_until_ready(loss2)
    assert jnp.allclose(loss2, ref, rtol=1e-4, atol=1e-5), (loss2, ref)

    # 'mean' reduction.
    loss_m = map_correlation_mse(x, y, reduction="mean", block_b=2)
    jax.block_until_ready(loss_m)
    ref_m = _reference(x, y, reduction="mean")
    assert jnp.allclose(loss_m, ref_m, rtol=1e-4, atol=1e-5), (loss_m, ref_m)

    # Degenerate all-zero map exercises the F.normalize eps clamp path.
    x0 = x.at[0].set(0.0)
    loss_d = map_correlation_mse(x0, y, reduction="sum")
    jax.block_until_ready(loss_d)
    ref_d = _reference(x0, y)
    assert jnp.allclose(loss_d, ref_d, rtol=1e-4, atol=1e-5), (loss_d, ref_d)

    print("KERNEL_OK")
</pallas_src>

<mosaic_0001>
module attributes {stable_mosaic.version = 11 : i64} {
  func.func @_map_corr_mse_kernel(%arg0: i32, %arg1: memref<1x16x32xf32, #tpu.memory_space<vmem>>, %arg2: memref<1x16x32xf32, #tpu.memory_space<vmem>>, %arg3: memref<1x8x128xf32, #tpu.memory_space<vmem>>) attributes {dimension_semantics = [#tpu.dimension_semantics<parallel>], iteration_bounds = array<i64: 4>, scalar_prefetch = 0 : i64, scratch_operands = 0 : i64, tpu.core_type = #tpu.core_type<tc>, window_params = [{transform_indices = @transform_0, window_bounds = array<i64: 1, 16, 32>}, {transform_indices = @transform_1, window_bounds = array<i64: 1, 16, 32>}, {transform_indices = @transform_2, window_bounds = array<i64: 1, 8, 128>}]} {
    %c0 = arith.constant 0 : index
    %c0_0 = arith.constant 0 : index
    %c0_1 = arith.constant 0 : index
    %0 = vector.load %arg1[%c0, %c0_0, %c0_1] : memref<1x16x32xf32, #tpu.memory_space<vmem>>, vector<1x16x32xf32>
    %c0_2 = arith.constant 0 : index
    %c0_3 = arith.constant 0 : index
    %c0_4 = arith.constant 0 : index
    %1 = vector.load %arg2[%c0_2, %c0_3, %c0_4] : memref<1x16x32xf32, #tpu.memory_space<vmem>>, vector<1x16x32xf32>
    %2 = tpu.transpose %0, [0, 2, 1] : vector<1x16x32xf32> -> vector<1x32x16xf32>
    %3 = tpu.transpose %1, [0, 2, 1] : vector<1x16x32xf32> -> vector<1x32x16xf32>
    "tpu.trace_start"() <{level = 10 : i32, message = "bdn,ben->bde"}> : () -> ()
    %cst = arith.constant dense<0.000000e+00> : vector<1x32x32xf32>
    %4 = tpu.matmul %2, %2, %cst {dimension_numbers = #tpu.dot_dimension_numbers<[2], [2], [1], [1], [0, 0, 0, 1, 1, 1], [0], [0]>} : vector<1x32x16xf32>, vector<1x32x16xf32>, vector<1x32x32xf32> -> vector<1x32x32xf32>
    %cst_5 = arith.constant dense<0.000000e+00> : vector<1x32x32xf32>
    %5 = tpu.matmul %3, %3, %cst_5 {dimension_numbers = #tpu.dot_dimension_numbers<[2], [2], [1], [1], [0, 0, 0, 1, 1, 1], [0], [0]>} : vector<1x32x16xf32>, vector<1x32x16xf32>, vector<1x32x32xf32> -> vector<1x32x32xf32>
    %cst_6 = arith.constant dense<0.000000e+00> : vector<1x32x32xf32>
    %6 = tpu.matmul %2, %3, %cst_6 {dimension_numbers = #tpu.dot_dimension_numbers<[2], [2], [1], [1], [0, 0, 0, 1, 1, 1], [0], [0]>} : vector<1x32x16xf32>, vector<1x32x16xf32>, vector<1x32x32xf32> -> vector<1x32x32xf32>
    "tpu.trace_stop"() : () -> ()
    %7 = arith.mulf %4, %4 : vector<1x32x32xf32>
    %cst_7 = arith.constant dense<0.000000e+00> : vector<1xf32>
    %8 = vector.multi_reduction <add>, %7, %cst_7 [1, 2] : vector<1x32x32xf32> to vector<1xf32>
    %9 = vector.shape_cast %8 : vector<1xf32> to vector<1x1x1xf32>
    %10 = arith.mulf %5, %5 : vector<1x32x32xf32>
    %cst_8 = arith.constant dense<0.000000e+00> : vector<1xf32>
    %11 = vector.multi_reduction <add>, %10, %cst_8 [1, 2] : vector<1x32x32xf32> to vector<1xf32>
    %12 = vector.shape_cast %11 : vector<1xf32> to vector<1x1x1xf32>
    %13 = arith.mulf %6, %6 : vector<1x32x32xf32>
    %cst_9 = arith.constant dense<0.000000e+00> : vector<1xf32>
    %14 = vector.multi_reduction <add>, %13, %cst_9 [1, 2] : vector<1x32x32xf32> to vector<1xf32>
    %15 = vector.shape_cast %14 : vector<1xf32> to vector<1x1x1xf32>
    %cst_10 = arith.constant 1.000000e-24 : f32
    %16 = vector.broadcast %cst_10 : f32 to vector<1x1x1xf32>
    %17 = arith.maximumf %9, %16 : vector<1x1x1xf32>
    %cst_11 = arith.constant 1.000000e-24 : f32
    %18 = vector.broadcast %cst_11 : f32 to vector<1x1x1xf32>
    %19 = arith.maximumf %12, %18 : vector<1x1x1xf32>
    %20 = math.rsqrt %17 : vector<1x1x1xf32>
    %21 = math.rsqrt %19 : vector<1x1x1xf32>
    %22 = arith.divf %9, %17 : vector<1x1x1xf32>
    %23 = arith.divf %12, %19 : vector<1x1x1xf32>
    %24 = arith.addf %22, %23 : vector<1x1x1xf32>
    %cst_12 = arith.constant 2.000000e+00 : f32
    %25 = vector.broadcast %cst_12 : f32 to vector<1x1x1xf32>
    %26 = arith.mulf %25, %15 : vector<1x1x1xf32>
    %27 = arith.mulf %20, %21 : vector<1x1x1xf32>
    %28 = arith.mulf %26, %27 : vector<1x1x1xf32>
    %29 = arith.subf %24, %28 : vector<1x1x1xf32>
    %30 = vector.shape_cast %29 : vector<1x1x1xf32> to vector<1x1x1x1xf32>
    %cst_13 = arith.constant dense<0.000000e+00> : vector<1xf32>
    %31 = vector.multi_reduction <add>, %30, %cst_13 [1, 2, 3] : vector<1x1x1x1xf32> to vector<1xf32>
    %32 = vector.shape_cast %31 : vector<1xf32> to vector<1x1x1x1xf32>
    %33 = vector.extract %32[0, 0, 0, 0] : f32 from vector<1x1x1x1xf32>
    %34 = vector.broadcast %33 : f32 to vector<1x8x128xf32>
    %c0_14 = arith.constant 0 : index
    %c0_15 = arith.constant 0 : index
    %c0_16 = arith.constant 0 : index
    %35 = vector.load %arg3[%c0_14, %c0_15, %c0_16] : memref<1x8x128xf32, #tpu.memory_space<vmem>>, vector<1x8x128xf32>
    tpu.vector_store %arg3[%c0_14, %c0_15, %c0_16], %34 {strides = array<i32>} : memref<1x8x128xf32, #tpu.memory_space<vmem>>, vector<1x8x128xf32>,
    return
  }
  func.func @transform_0(%arg0: i32) -> (i32, i32, i32) {
    %c0_i32 = arith.constant 0 : i32
    %c0_i32_0 = arith.constant 0 : i32
    %c0_i32_1 = arith.constant 0 : i32
    return %arg0, %c0_i32, %c0_i32_0 : i32, i32, i32
  }
  func.func @transform_1(%arg0: i32) -> (i32, i32, i32) {
    %c0_i32 = arith.constant 0 : i32
    %c0_i32_0 = arith.constant 0 : i32
    %c0_i32_1 = arith.constant 0 : i32
    return %arg0, %c0_i32, %c0_i32_0 : i32, i32, i32
  }
  func.func @transform_2(%arg0: i32) -> (i32, i32, i32) {
    %c0_i32 = arith.constant 0 : i32
    %c0_i32_0 = arith.constant 0 : i32
    %c0_i32_1 = arith.constant 0 : i32
    return %arg0, %c0_i32, %c0_i32_0 : i32, i32, i32
  }
}

</mosaic_0001>

<llo_original>
// kernel: tpu_custom_call.1
$region0: #{tpu_custom_call.1}
  #allocation0 [shape = 'u32[]', space=smem, size = 0x4, offset = 0x4, fixed_abs, tag = 'smem constant byte address 0x4 - core index']
  #allocation1 [shape = 'u32[144,128]{1,0:T(1,128)}', space=vmem, size = 0x12000, scoped, tag = 'internal scratch']
  %s0 = inlined_call_operand.hbm [shape: f32[4,16,32], index: 0, kind: input, shape index: {}]
  %s1 = inlined_call_operand.hbm [shape: f32[4,16,32], index: 1, kind: input, shape index: {}]
  %s2 = inlined_call_operand.hbm [shape: f32[4,8,128], index: 2, kind: output, shape index: {}]
  %s3 = sld [smem:[#allocation0]]
  $region49: #{tpu_custom_call.1} parent=0
    _
  %s5 = ssub.s32 1, %s3
  %s6 = scalar_select 0, %s5, %s3
  $region1: #{tpu_custom_call.1} parent=0
    #allocation2 [shape = 'u8[16384]{0}', space=vmem, size = 0x4000, scoped, tag = 'input window, operand 0']
    #allocation3 [shape = 's32[2]{0}', space=sflag, size = 0x8, scoped, tag = 'scoped memory for tpu_custom_call.1']
    #allocation4 [shape = 's32[2]{0}', space=sflag, size = 0x8, scoped, tag = 'scoped memory for tpu_custom_call.1']
    #allocation5 [shape = 'u8[16384]{0}', space=vmem, size = 0x4000, scoped, tag = 'input window, operand 1']
    #allocation6 [shape = 's32[2]{0}', space=sflag, size = 0x8, scoped, tag = 'scoped memory for tpu_custom_call.1']
    #allocation7 [shape = 'u8[8192]{0}', space=vmem, size = 0x2000, scoped, tag = 'output window, operand 0']
    %7 = vsyncpa [#allocation3], 0
    %s8 = scalar_lea.sflag [#allocation3], 1
    %9 = vsyncpa %s8, 0
    %10 = vsyncpa [#allocation6], 0
    %s11 = scalar_lea.sflag [#allocation6], 1
    %12 = vsyncpa %s11, 0
    %13 = vsyncpa [#allocation4], 0
    %s14 = scalar_lea.sflag [#allocation4], 1
    %15 = vsyncpa %s14, 0
    loop: start=0, step=1, limit=6
    $region2: #{tpu_custom_call.1} parent=1 // loop_pre_header
      _
    $region3: #{tpu_custom_call.1} parent=1 // loop_header
      %s17 = sphi 0, %s21
      %p18 = scmp.ge.s32.totalorder %s17, 6
      %s27 = sphi 0, %s29
      %s30 = sphi 0, %s27
      %s31 = sphi 0, %s30
      %s47 = sphi 0, %s31
      %s53 = sphi 0, %s55
      %s56 = sphi 0, %s53
      %s57 = sphi 0, %s56
      %s73 = sphi 0, %s57
      %s79 = sphi 0, %s81
      %s82 = sphi 0, %s79
      %s83 = sphi 0, %s82
      %s99 = sphi 0, %s83
    $region4: #{tpu_custom_call.1} parent=1 // loop_header_branch
      %20 = sbr.rel (%p18) target = $region8
    $region5: #{tpu_custom_call.1} parent=1 // loop_body
      %s22 = ssub.s32 %s17, 1
      %s23 = ssub.s32 %s17, 2
      %s24 = sadd.s32 %s17, 1
      %s25 = ssub.s32 %s17, %s24
      %p26 = scmp.eq.s32.totalorder %s25, 0
      %s28 = sadd.s32 %s27, 1
      %s29 = scalar_select %p26, %s27, %s28
      %p32 = pneg %p26
      %p33 = scmp.eq.s32.totalorder %s17, 3
      %p34 = por %p32, %p33
      %p35 = scmp.ne.s32.totalorder %s27, %s30
      %p36 = scmp.eq.s32.totalorder %s17, 0
      %p37 = por %p35, %p36
      %p38 = scmp.ne.s32.totalorder %s27, %s30
      %p39 = scmp.eq.s32.totalorder %s22, 3
      %p40 = por %p38, %p39
      %p41 = scmp.ne.s32.totalorder %s30, %s31
      %p42 = scmp.eq.s32.totalorder %s22, 0
      %p43 = por %p41, %p42
      %p44 = scmp.ne.s32.totalorder %s30, %s31
      %p45 = scmp.eq.s32.totalorder %s23, 3
      %p46 = por %p44, %p45
      %p48 = scmp.ne.s32.totalorder %s31, %s47
      %p49 = scmp.eq.s32.totalorder %s23, 0
      %p50 = por %p48, %p49
      %s51 = ssub.s32 %s17, %s24
      %p52 = scmp.eq.s32.totalorder %s51, 0
      %s54 = sadd.s32 %s53, 1
      %s55 = scalar_select %p52, %s53, %s54
      %p58 = pneg %p52
      %p59 = scmp.eq.s32.totalorder %s17, 3
      %p60 = por %p58, %p59
      %p61 = scmp.ne.s32.totalorder %s53, %s56
      %p62 = scmp.eq.s32.totalorder %s17, 0
      %p63 = por %p61, %p62
      %p64 = scmp.ne.s32.totalorder %s53, %s56
      %p65 = scmp.eq.s32.totalorder %s22, 3
      %p66 = por %p64, %p65
      %p67 = scmp.ne.s32.totalorder %s56, %s57
      %p68 = scmp.eq.s32.totalorder %s22, 0
      %p69 = por %p67, %p68
      %p70 = scmp.ne.s32.totalorder %s56, %s57
      %p71 = scmp.eq.s32.totalorder %s23, 3
      %p72 = por %p70, %p71
      %p74 = scmp.ne.s32.totalorder %s57, %s73
      %p75 = scmp.eq.s32.totalorder %s23, 0
      %p76 = por %p74, %p75
      %s77 = ssub.s32 %s17, %s24
      %p78 = scmp.eq.s32.totalorder %s77, 0
      %s80 = sadd.s32 %s79, 1
      %s81 = scalar_select %p78, %s79, %s80
      %p84 = pneg %p78
      %p85 = scmp.eq.s32.totalorder %s17, 3
      %p86 = por %p84, %p85
      %p87 = scmp.ne.s32.totalorder %s79, %s82
      %p88 = scmp.eq.s32.totalorder %s17, 0
      %p89 = por %p87, %p88
      %p90 = scmp.ne.s32.totalorder %s79, %s82
      %p91 = scmp.eq.s32.totalorder %s22, 3
      %p92 = por %p90, %p91
      %p93 = scmp.ne.s32.totalorder %s82, %s83
      %p94 = scmp.eq.s32.totalorder %s22, 0
      %p95 = por %p93, %p94
      %p96 = scmp.ne.s32.totalorder %s82, %s83
      %p97 = scmp.eq.s32.totalorder %s23, 3
      %p98 = por %p96, %p97
      %p100 = scmp.ne.s32.totalorder %s83, %s99
      %p101 = scmp.eq.s32.totalorder %s23, 0
      %p102 = por %p100, %p101
      %p103 = scmp.le.s32.totalorder 1, %s17
      %p104 = scmp.lt.s32.totalorder %s17, 5
      %p105 = pnand %p103, %p104
      %p106 = pneg %p105
      // Predicated region
      $region9: #{tpu_custom_call.1} parent=5 // pred_check
        _
      $region10: #{tpu_custom_call.1} parent=5 // pred_check_branch
        %108 = sbr.rel (%p105) target = $region12
      $region11: #{tpu_custom_call.1} parent=5 // pred_region
        %s109 = ssub.s32 %s17, 1
      $region12: #{tpu_custom_call.1} parent=5 // pred_fallthru
        _
      %p110 = scmp.lt.s32.totalorder %s17, 4
      // Predicated region
      $region13: #{tpu_custom_call.1} parent=5 // pred_check
        %p111 = pneg %p110
      $region14: #{tpu_custom_call.1} parent=5 // pred_check_branch
        %113 = sbr.rel (%p111) target = $region16
      $region15: #{tpu_custom_call.1} parent=5 // pred_region
        // Predicated region
        $region17: #{tpu_custom_call.1} parent=15 // pred_check
          %p114 = pneg %p37
        $region18: #{tpu_custom_call.1} parent=15 // pred_check_branch
          %116 = sbr.rel (%p114) target = $region20
        $region19: #{tpu_custom_call.1} parent=15 // pred_region
          %s117 = sand.u32 %s27, 1
          %s118 = scalar_lea.sflag [#allocation3], %s117
          %s119 = sand.u32 %s27, 1
          %s120 = smul.addr %s119, 16
          %s121 = scalar_lea.vmem [#allocation2], %s120
          %s123 = ssub.s32 256, 256
          %124 = vsyncadd %s118, %s123
          %s125 = smul.addr %s17, 2
          %s126 = smul.addr %s125, 128
          %s127 = scalar_lea.hbm %s0, %s126
          %s128 = sshll.u32 %s121, 4
          %s129 = int_to_ptr.vmem [resolvable:$true] %s128
          %134 = dma.hbm_to_vmem [thread:$0]  %s127, 256, %s129, %s118, 128, 128, 8
        $region20: #{tpu_custom_call.1} parent=15 // pred_fallthru
          _
        // Predicated region
        $region21: #{tpu_custom_call.1} parent=15 // pred_check
          %p135 = pneg %p63
        $region22: #{tpu_custom_call.1} parent=15 // pred_check_branch
          %137 = sbr.rel (%p135) target = $region24
        $region23: #{tpu_custom_call.1} parent=15 // pred_region
          %s138 = sand.u32 %s53, 1
          %s139 = scalar_lea.sflag [#allocation6], %s138
          %s140 = sand.u32 %s53, 1
          %s141 = smul.addr %s140, 16
          %s142 = scalar_lea.vmem [#allocation5], %s141
          %s144 = ssub.s32 256, 256
          %145 = vsyncadd %s139, %s144
          %s146 = smul.addr %s17, 2
          %s147 = smul.addr %s146, 128
          %s148 = scalar_lea.hbm %s1, %s147
          %s149 = sshll.u32 %s142, 4
          %s150 = int_to_ptr.vmem [resolvable:$true] %s149
          %155 = dma.hbm_to_vmem [thread:$0]  %s148, 256, %s150, %s139, 128, 128, 8
        $region24: #{tpu_custom_call.1} parent=15 // pred_fallthru
          _
      $region16: #{tpu_custom_call.1} parent=5 // pred_fallthru
        _
      %p156 = scmp.le.s32.totalorder 1, %s17
      %p157 = scmp.lt.s32.totalorder %s17, 5
      %p158 = pnand %p156, %p157
      %p159 = pneg %p158
      // Predicated region
      $region25: #{tpu_custom_call.1} parent=5 // pred_check
        _
      $region26: #{tpu_custom_call.1} parent=5 // pred_check_branch
        %161 = sbr.rel (%p158) target = $region28
      $region27: #{tpu_custom_call.1} parent=5 // pred_region
        %s162 = ssub.s32 %s17, 1
        %s163 = sand.u32 %s30, 1
        %s164 = scalar_lea.sflag [#allocation3], %s163
        %s165 = sand.u32 %s30, 1
        %s166 = smul.addr %s165, 16
        %s167 = scalar_lea.vmem [#allocation2], %s166
        // Predicated region
        $region29: #{tpu_custom_call.1} parent=27 // pred_check
          %p168 = pneg %p43
        $region30: #{tpu_custom_call.1} parent=27 // pred_check_branch
          %170 = sbr.rel (%p168) target = $region32
        $region31: #{tpu_custom_call.1} parent=27 // pred_region
          %171 = dma.done %s164, 256
        $region32: #{tpu_custom_call.1} parent=27 // pred_fallthru
          _
        %s172 = sand.u32 %s56, 1
        %s173 = scalar_lea.sflag [#allocation6], %s172
        %s174 = sand.u32 %s56, 1
        %s175 = smul.addr %s174, 16
        %s176 = scalar_lea.vmem [#allocation5], %s175
        // Predicated region
        $region33: #{tpu_custom_call.1} parent=27 // pred_check
          %p177 = pneg %p69
        $region34: #{tpu_custom_call.1} parent=27 // pred_check_branch
          %179 = sbr.rel (%p177) target = $region36
        $region35: #{tpu_custom_call.1} parent=27 // pred_region
          %180 = dma.done %s173, 256
        $region36: #{tpu_custom_call.1} parent=27 // pred_fallthru
          _
        %s181 = sand.u32 %s30, 1
        %s182 = scalar_lea.sflag [#allocation3], %s181
        %s183 = sand.u32 %s30, 1
        %s184 = smul.addr %s183, 16
        %s185 = scalar_lea.vmem [#allocation2], %s184
        %p186 = pneg %p43
        %p187 = pneg %p40
        %s188 = sand.u32 %s56, 1
        %s189 = scalar_lea.sflag [#allocation6], %s188
        %s190 = sand.u32 %s56, 1
        %s191 = smul.addr %s190, 16
        %s192 = scalar_lea.vmem [#allocation5], %s191
        %p193 = pneg %p69
        %p194 = pneg %p66
        %p195 = pneg %p95
        %p196 = pneg %p92
        %s197 = sand.u32 %s82, 1
        %s198 = scalar_lea.sflag [#allocation4], %s197
        %s199 = sand.u32 %s82, 1
        %s200 = smul.addr %s199, 8
        %s201 = scalar_lea.vmem [#allocation7], %s200
        %v202 = vld [vmem:[%s167] sm:$0xff]
        %v203 = vld [vmem:[%s167 + $0x8] sm:$0xff]
        %v204 = vld [vmem:[%s176] sm:$0xff]
        %v205 = vld [vmem:[%s176 + $0x8] sm:$0xff]
        %206 = vxpose.xlu0.b32.start [1/16] %v202, 128
        %207 = vxpose.xlu0.b32.cont [2/16] %v203, 128
        %208 = vxpose.xlu0.b32.cont [3/16] 0.0, 128
        %209 = vxpose.xlu0.b32.cont [4/16] 0.0, 128
        %210 = vxpose.xlu0.b32.cont [5/16] 0.0, 128
        %211 = vxpose.xlu0.b32.cont [6/16] 0.0, 128
        %212 = vxpose.xlu0.b32.cont [7/16] 0.0, 128
        %213 = vxpose.xlu0.b32.cont [8/16] 0.0, 128
        %214 = vxpose.xlu0.b32.cont [9/16] 0.0, 128
        %215 = vxpose.xlu0.b32.cont [10/16] 0.0, 128
        %216 = vxpose.xlu0.b32.cont [11/16] 0.0, 128
        %217 = vxpose.xlu0.b32.cont [12/16] 0.0, 128
        %218 = vxpose.xlu0.b32.cont [13/16] 0.0, 128
        %219 = vxpose.xlu0.b32.cont [14/16] 0.0, 128
        %220 = vxpose.xlu0.b32.cont [15/16] 0.0, 128
        %221 = vxpose.xlu0.b32.end [16/16] 0.0, 128
        %v222 = vpop.trf.xlu0
        %v223 = vpop.trf.xlu0
        %v224 = vpop.trf.xlu0
        %v225 = vpop.trf.xlu0
        %v226 = vpop.trf.xlu0
        %v227 = vpop.trf.xlu0
        %v228 = vpop.trf.xlu0
        %v229 = vpop.trf.xlu0
        %v230 = vpop.trf.xlu0
        %v231 = vpop.trf.xlu0
        %v232 = vpop.trf.xlu0
        %v233 = vpop.trf.xlu0
        %v234 = vpop.trf.xlu0
        %v235 = vpop.trf.xlu0
        %v236 = vpop.trf.xlu0
        %v237 = vpop.trf.xlu0
        %238 = vxpose.xlu0.b32.start [1/16] %v204, 128
        %239 = vxpose.xlu0.b32.cont [2/16] %v205, 128
        %240 = vxpose.xlu0.b32.cont [3/16] 0.0, 128
        %241 = vxpose.xlu0.b32.cont [4/16] 0.0, 128
        %242 = vxpose.xlu0.b32.cont [5/16] 0.0, 128
        %243 = vxpose.xlu0.b32.cont [6/16] 0.0, 128
        %244 = vxpose.xlu0.b32.cont [7/16] 0.0, 128
        %245 = vxpose.xlu0.b32.cont [8/16] 0.0, 128
        %246 = vxpose.xlu0.b32.cont [9/16] 0.0, 128
        %247 = vxpose.xlu0.b32.cont [10/16] 0.0, 128
        %248 = vxpose.xlu0.b32.cont [11/16] 0.0, 128
        %249 = vxpose.xlu0.b32.cont [12/16] 0.0, 128
        %250 = vxpose.xlu0.b32.cont [13/16] 0.0, 128
        %251 = vxpose.xlu0.b32.cont [14/16] 0.0, 128
        %252 = vxpose.xlu0.b32.cont [15/16] 0.0, 128
        %253 = vxpose.xlu0.b32.end [16/16] 0.0, 128
        %v254 = vpop.trf.xlu0
        %v255 = vpop.trf.xlu0
        %v256 = vpop.trf.xlu0
        %v257 = vpop.trf.xlu0
        %v258 = vpop.trf.xlu0
        %v259 = vpop.trf.xlu0
        %v260 = vpop.trf.xlu0
        %v261 = vpop.trf.xlu0
        %v262 = vpop.trf.xlu0
        %v263 = vpop.trf.xlu0
        %v264 = vpop.trf.xlu0
        %v265 = vpop.trf.xlu0
        %v266 = vpop.trf.xlu0
        %v267 = vpop.trf.xlu0
        %v268 = vpop.trf.xlu0
        %v269 = vpop.trf.xlu0
        %vm270 = vcmask 130048
        %v272 = vsel %vm270, %v222, 0
        %v275 = vsel %vm270, %v223, 0
        %v278 = vsel %vm270, %v224, 0
        %v281 = vsel %vm270, %v225, 0
        %283 = vmatprep.subr.mxu0 0.0
        %284 = vmatpush1.xpose.msra.mxu0 %v272
        %285 = vmatprep.subr.mxu0 0.0
        %286 = vmatpush1.xpose.msra.mxu0 %v275
        %287 = vmatprep.subr.mxu0 0.0
        %288 = vmatpush1.xpose.msra.mxu0 %v278
        %289 = vmatprep.subr.mxu0 0.0
        %290 = vmatpush1.xpose.msra.mxu0 %v281
        %291 = vmatprep.subr.mxu0 0.0
        %292 = vmatpush1.xpose.msra.mxu0 0.0
        %293 = vmatprep.subr.mxu0 0.0
        %294 = vmatpush1.xpose.msra.mxu0 0.0
        %295 = vmatprep.subr.mxu0 0.0
        %296 = vmatpush1.xpose.msra.mxu0 0.0
        %297 = vmatprep.subr.mxu0 0.0
        %298 = vmatpush1.xpose.msra.mxu0 0.0
        %299 = vmatprep.subr.mxu0 0.0
        %300 = vmatpush1.xpose.msra.mxu0 0.0
        %301 = vmatprep.subr.mxu0 0.0
        %302 = vmatpush1.xpose.msra.mxu0 0.0
        %303 = vmatprep.subr.mxu0 0.0
        %304 = vmatpush1.xpose.msra.mxu0 0.0
        %305 = vmatprep.subr.mxu0 0.0
        %306 = vmatpush1.xpose.msra.mxu0 0.0
        %307 = vmatprep.subr.mxu0 0.0
        %308 = vmatpush1.xpose.msra.mxu0 0.0
        %309 = vmatprep.subr.mxu0 0.0
        %310 = vmatpush1.xpose.msra.mxu0 0.0
        %311 = vmatprep.subr.mxu0 0.0
        %312 = vmatpush1.xpose.msra.mxu0 0.0
        %313 = vmatprep.subr.mxu0 0.0
        %314 = vmatpush1.xpose.msra.mxu0 0.0
        %315 = vmatprep.subr.mxu0 0.0
        %316 = vmatpush1.xpose.msra.mxu0 0.0
        %317 = vmatprep.subr.mxu0 0.0
        %318 = vmatpush1.xpose.msra.mxu0 0.0
        %319 = vmatprep.subr.mxu0 0.0
        %320 = vmatpush1.xpose.msra.mxu0 0.0
        %321 = vmatprep.subr.mxu0 0.0
        %322 = vmatpush1.xpose.msra.mxu0 0.0
        %323 = vmatprep.subr.mxu0 0.0
        %324 = vmatpush1.xpose.msra.mxu0 0.0
        %325 = vmatprep.subr.mxu0 0.0
        %326 = vmatpush1.xpose.msra.mxu0 0.0
        %327 = vmatprep.subr.mxu0 0.0
        %328 = vmatpush1.xpose.msra.mxu0 0.0
        %329 = vmatprep.subr.mxu0 0.0
        %330 = vmatpush1.xpose.msra.mxu0 0.0
        %331 = vmatprep.subr.mxu0 0.0
        %332 = vmatpush1.xpose.msra.mxu0 0.0
        %333 = vmatprep.subr.mxu0 0.0
        %334 = vmatpush1.xpose.msra.mxu0 0.0
        %335 = vmatprep.subr.mxu0 0.0
        %336 = vmatpush1.xpose.msra.mxu0 0.0
        %337 = vmatprep.subr.mxu0 0.0
        %338 = vmatpush1.xpose.msra.mxu0 0.0
        %339 = vmatprep.subr.mxu0 0.0
        %340 = vmatpush1.xpose.msra.mxu0 0.0
        %341 = vmatprep.subr.mxu0 0.0
        %342 = vmatpush1.xpose.msra.mxu0 0.0
        %343 = vmatprep.subr.mxu0 0.0
        %344 = vmatpush1.xpose.msra.mxu0 0.0
        %345 = vmatprep.subr.mxu0 0.0
        %346 = vmatpush1.xpose.msra.mxu0 0.0
        %347 = vmatprep.mubr.f32.mxu0 0.0
        %348 = vmatmul.mubr.f32.gmra.mrb[0].mxu0 %v272
        %v349 = vpop.f32.mrb[0].mxu0
        %v350 = vadd.f32 0.0, %v349
        %v351 = vpop.f32.mrb[0].mxu0
        %352 = vmatprep.mubr.f32.mxu0 0.0
        %353 = vmatmul.mubr.f32.gmra.mrb[0].mxu0 %v275
        %v354 = vpop.f32.mrb[0].mxu0
        %v355 = vadd.f32 0.0, %v354
        %v356 = vpop.f32.mrb[0].mxu0
        %357 = vmatprep.mubr.f32.mxu0 0.0
        %358 = vmatmul.mubr.f32.gmra.mrb[0].mxu0 %v278
        %v359 = vpop.f32.mrb[0].mxu0
        %v360 = vadd.f32 0.0, %v359
        %v361 = vpop.f32.mrb[0].mxu0
        %362 = vmatprep.mubr.f32.mxu0 0.0
        %363 = vmatmul.mubr.f32.gmra.mrb[0].mxu0 %v281
        %v364 = vpop.f32.mrb[0].mxu0
        %v365 = vadd.f32 0.0, %v364
        %v366 = vpop.f32.mrb[0].mxu0
        %367 = vdwg.mxu0
        %v369 = vsel %vm270, %v254, 0
        %v372 = vsel %vm270, %v255, 0
        %v375 = vsel %vm270, %v256, 0
        %v378 = vsel %vm270, %v257, 0
        %380 = vmatprep.subr.mxu0 0.0
        %381 = vmatpush1.xpose.msra.mxu0 %v369
        %382 = vmatprep.subr.mxu0 0.0
        %383 = vmatpush1.xpose.msra.mxu0 %v372
        %384 = vmatprep.subr.mxu0 0.0
        %385 = vmatpush1.xpose.msra.mxu0 %v375
        %386 = vmatprep.subr.mxu0 0.0
        %387 = vmatpush1.xpose.msra.mxu0 %v378
        %388 = vmatprep.subr.mxu0 0.0
        %389 = vmatpush1.xpose.msra.mxu0 0.0
        %390 = vmatprep.subr.mxu0 0.0
        %391 = vmatpush1.xpose.msra.mxu0 0.0
        %392 = vmatprep.subr.mxu0 0.0
        %393 = vmatpush1.xpose.msra.mxu0 0.0
        %394 = vmatprep.subr.mxu0 0.0
        %395 = vmatpush1.xpose.msra.mxu0 0.0
        %396 = vmatprep.subr.mxu0 0.0
        %397 = vmatpush1.xpose.msra.mxu0 0.0
        %398 = vmatprep.subr.mxu0 0.0
        %399 = vmatpush1.xpose.msra.mxu0 0.0
        %400 = vmatprep.subr.mxu0 0.0
        %401 = vmatpush1.xpose.msra.mxu0 0.0
        %402 = vmatprep.subr.mxu0 0.0
        %403 = vmatpush1.xpose.msra.mxu0 0.0
        %404 = vmatprep.subr.mxu0 0.0
        %405 = vmatpush1.xpose.msra.mxu0 0.0
        %406 = vmatprep.subr.mxu0 0.0
        %407 = vmatpush1.xpose.msra.mxu0 0.0
        %408 = vmatprep.subr.mxu0 0.0
        %409 = vmatpush1.xpose.msra.mxu0 0.0
        %410 = vmatprep.subr.mxu0 0.0
        %411 = vmatpush1.xpose.msra.mxu0 0.0
        %412 = vmatprep.subr.mxu0 0.0
        %413 = vmatpush1.xpose.msra.mxu0 0.0
        %414 = vmatprep.subr.mxu0 0.0
        %415 = vmatpush1.xpose.msra.mxu0 0.0
        %416 = vmatprep.subr.mxu0 0.0
        %417 = vmatpush1.xpose.msra.mxu0 0.0
        %418 = vmatprep.subr.mxu0 0.0
        %419 = vmatpush1.xpose.msra.mxu0 0.0
        %420 = vmatprep.subr.mxu0 0.0
        %421 = vmatpush1.xpose.msra.mxu0 0.0
        %422 = vmatprep.subr.mxu0 0.0
        %423 = vmatpush1.xpose.msra.mxu0 0.0
        %424 = vmatprep.subr.mxu0 0.0
        %425 = vmatpush1.xpose.msra.mxu0 0.0
        %426 = vmatprep.subr.mxu0 0.0
        %427 = vmatpush1.xpose.msra.mxu0 0.0
        %428 = vmatprep.subr.mxu0 0.0
        %429 = vmatpush1.xpose.msra.mxu0 0.0
        %430 = vmatprep.subr.mxu0 0.0
        %431 = vmatpush1.xpose.msra.mxu0 0.0
        %432 = vmatprep.subr.mxu0 0.0
        %433 = vmatpush1.xpose.msra.mxu0 0.0
        %434 = vmatprep.subr.mxu0 0.0
        %435 = vmatpush1.xpose.msra.mxu0 0.0
        %436 = vmatprep.subr.mxu0 0.0
        %437 = vmatpush1.xpose.msra.mxu0 0.0
        %438 = vmatprep.subr.mxu0 0.0
        %439 = vmatpush1.xpose.msra.mxu0 0.0
        %440 = vmatprep.subr.mxu0 0.0
        %441 = vmatpush1.xpose.msra.mxu0 0.0
        %442 = vmatprep.subr.mxu0 0.0
        %443 = vmatpush1.xpose.msra.mxu0 0.0
        %444 = vmatprep.mubr.f32.mxu0 0.0
        %445 = vmatmul.mubr.f32.gmra.mrb[0].mxu0 %v369
        %v446 = vpop.f32.mrb[0].mxu0
        %v447 = vadd.f32 0.0, %v446
        %v448 = vpop.f32.mrb[0].mxu0
        %449 = vmatprep.mubr.f32.mxu0 0.0
        %450 = vmatmul.mubr.f32.gmra.mrb[0].mxu0 %v372
        %v451 = vpop.f32.mrb[0].mxu0
        %v452 = vadd.f32 0.0, %v451
        %v453 = vpop.f32.mrb[0].mxu0
        %454 = vmatprep.mubr.f32.mxu0 0.0
        %455 = vmatmul.mubr.f32.gmra.mrb[0].mxu0 %v375
        %v456 = vpop.f32.mrb[0].mxu0
        %v457 = vadd.f32 0.0, %v456
        %v458 = vpop.f32.mrb[0].mxu0
        %459 = vmatprep.mubr.f32.mxu0 0.0
        %460 = vmatmul.mubr.f32.gmra.mrb[0].mxu0 %v378
        %v461 = vpop.f32.mrb[0].mxu0
        %v462 = vadd.f32 0.0, %v461
        %v463 = vpop.f32.mrb[0].mxu0
        %464 = vdwg.mxu0
        %465 = vmatprep.subr.mxu0 0.0
        %466 = vmatpush1.xpose.msra.mxu0 %v369
        %467 = vmatprep.subr.mxu0 0.0
        %468 = vmatpush1.xpose.msra.mxu0 %v372
        %469 = vmatprep.subr.mxu0 0.0
        %470 = vmatpush1.xpose.msra.mxu0 %v375
        %471 = vmatprep.subr.mxu0 0.0
        %472 = vmatpush1.xpose.msra.mxu0 %v378
        %473 = vmatprep.subr.mxu0 0.0
        %474 = vmatpush1.xpose.msra.mxu0 0.0
        %475 = vmatprep.subr.mxu0 0.0
        %476 = vmatpush1.xpose.msra.mxu0 0.0
        %477 = vmatprep.subr.mxu0 0.0
        %478 = vmatpush1.xpose.msra.mxu0 0.0
        %479 = vmatprep.subr.mxu0 0.0
        %480 = vmatpush1.xpose.msra.mxu0 0.0
        %481 = vmatprep.subr.mxu0 0.0
        %482 = vmatpush1.xpose.msra.mxu0 0.0
        %483 = vmatprep.subr.mxu0 0.0
        %484 = vmatpush1.xpose.msra.mxu0 0.0
        %485 = vmatprep.subr.mxu0 0.0
        %486 = vmatpush1.xpose.msra.mxu0 0.0
        %487 = vmatprep.subr.mxu0 0.0
        %488 = vmatpush1.xpose.msra.mxu0 0.0
        %489 = vmatprep.subr.mxu0 0.0
        %490 = vmatpush1.xpose.msra.mxu0 0.0
        %491 = vmatprep.subr.mxu0 0.0
        %492 = vmatpush1.xpose.msra.mxu0 0.0
        %493 = vmatprep.subr.mxu0 0.0
        %494 = vmatpush1.xpose.msra.mxu0 0.0
        %495 = vmatprep.subr.mxu0 0.0
        %496 = vmatpush1.xpose.msra.mxu0 0.0
        %497 = vmatprep.subr.mxu0 0.0
        %498 = vmatpush1.xpose.msra.mxu0 0.0
        %499 = vmatprep.subr.mxu0 0.0
        %500 = vmatpush1.xpose.msra.mxu0 0.0
        %501 = vmatprep.subr.mxu0 0.0
        %502 = vmatpush1.xpose.msra.mxu0 0.0
        %503 = vmatprep.subr.mxu0 0.0
        %504 = vmatpush1.xpose.msra.mxu0 0.0
        %505 = vmatprep.subr.mxu0 0.0
        %506 = vmatpush1.xpose.msra.mxu0 0.0
        %507 = vmatprep.subr.mxu0 0.0
        %508 = vmatpush1.xpose.msra.mxu0 0.0
        %509 = vmatprep.subr.mxu0 0.0
        %510 = vmatpush1.xpose.msra.mxu0 0.0
        %511 = vmatprep.subr.mxu0 0.0
        %512 = vmatpush1.xpose.msra.mxu0 0.0
        %513 = vmatprep.subr.mxu0 0.0
        %514 = vmatpush1.xpose.msra.mxu0 0.0
        %515 = vmatprep.subr.mxu0 0.0
        %516 = vmatpush1.xpose.msra.mxu0 0.0
        %517 = vmatprep.subr.mxu0 0.0
        %518 = vmatpush1.xpose.msra.mxu0 0.0
        %519 = vmatprep.subr.mxu0 0.0
        %520 = vmatpush1.xpose.msra.mxu0 0.0
        %521 = vmatprep.subr.mxu0 0.0
        %522 = vmatpush1.xpose.msra.mxu0 0.0
        %523 = vmatprep.subr.mxu0 0.0
        %524 = vmatpush1.xpose.msra.mxu0 0.0
        %525 = vmatprep.subr.mxu0 0.0
        %526 = vmatpush1.xpose.msra.mxu0 0.0
        %527 = vmatprep.subr.mxu0 0.0
        %528 = vmatpush1.xpose.msra.mxu0 0.0
        %529 = vmatprep.mubr.f32.mxu0 0.0
        %530 = vmatmul.mubr.f32.gmra.mrb[0].mxu0 %v272
        %v531 = vpop.f32.mrb[0].mxu0
        %v532 = vadd.f32 0.0, %v531
        %v533 = vpop.f32.mrb[0].mxu0
        %534 = vmatprep.mubr.f32.mxu0 0.0
        %535 = vmatmul.mubr.f32.gmra.mrb[0].mxu0 %v275
        %v536 = vpop.f32.mrb[0].mxu0
        %v537 = vadd.f32 0.0, %v536
        %v538 = vpop.f32.mrb[0].mxu0
        %539 = vmatprep.mubr.f32.mxu0 0.0
        %540 = vmatmul.mubr.f32.gmra.mrb[0].mxu0 %v278
        %v541 = vpop.f32.mrb[0].mxu0
        %v542 = vadd.f32 0.0, %v541
        %v543 = vpop.f32.mrb[0].mxu0
        %544 = vmatprep.mubr.f32.mxu0 0.0
        %545 = vmatmul.mubr.f32.gmra.mrb[0].mxu0 %v281
        %v546 = vpop.f32.mrb[0].mxu0
        %v547 = vadd.f32 0.0, %v546
        %v548 = vpop.f32.mrb[0].mxu0
        %549 = vdwg.mxu0
        %v550 = vmul.f32 %v350, %v350
        %v551 = vmul.f32 %v355, %v355
        %v552 = vmul.f32 %v360, %v360
        %v553 = vmul.f32 %v365, %v365
        %vm554 = vcmask 261120
        %v555 = vsel %vm554, %v550, 0.0
        %v556 = vsel %vm554, %v551, 0.0
        %v557 = vadd.f32 %v555, %v556
        %v558 = vsel %vm554, %v552, 0.0
        %v559 = vadd.f32 %v557, %v558
        %v560 = vsel %vm554, %v553, 0.0
        %v561 = vadd.f32 %v559, %v560
        %562 = vadd.xlane.f32.xlu0 %v561
        %v563 = vpop.xlane.xlu0 %562
        %v564 = vrot.slane %v563, 4
        %v565 = vadd.f32 %v563, %v564
        %v566 = vrot.slane %v565, 2
        %v567 = vadd.f32 %v565, %v566
        %v568 = vrot.slane %v567, 1
        %v569 = vadd.f32 %v567, %v568
        %v570 = vmul.f32 %v447, %v447
        %v571 = vmul.f32 %v452, %v452
        %v572 = vmul.f32 %v457, %v457
        %v573 = vmul.f32 %v462, %v462
        %v574 = vsel %vm554, %v570, 0.0
        %v575 = vsel %vm554, %v571, 0.0
        %v576 = vadd.f32 %v574, %v575
        %v577 = vsel %vm554, %v572, 0.0
        %v578 = vadd.f32 %v576, %v577
        %v579 = vsel %vm554, %v573, 0.0
        %v580 = vadd.f32 %v578, %v579
        %581 = vadd.xlane.f32.xlu0 %v580
        %v582 = vpop.xlane.xlu0 %581
        %v583 = vrot.slane %v582, 4
        %v584 = vadd.f32 %v582, %v583
        %v585 = vrot.slane %v584, 2
        %v586 = vadd.f32 %v584, %v585
        %v587 = vrot.slane %v586, 1
        %v588 = vadd.f32 %v586, %v587
        %v589 = vmul.f32 %v532, %v532
        %v590 = vmul.f32 %v537, %v537
        %v591 = vmul.f32 %v542, %v542
        %v592 = vmul.f32 %v547, %v547
        %v593 = vsel %vm554, %v589, 0.0
        %v594 = vsel %vm554, %v590, 0.0
        %v595 = vadd.f32 %v593, %v594
        %v596 = vsel %vm554, %v591, 0.0
        %v597 = vadd.f32 %v595, %v596
        %v598 = vsel %vm554, %v592, 0.0
        %v599 = vadd.f32 %v597, %v598
        %600 = vadd.xlane.f32.xlu0 %v599
        %v601 = vpop.xlane.xlu0 %600
        %v602 = vrot.slane %v601, 4
        %v603 = vadd.f32 %v601, %v602
        %v604 = vrot.slane %v603, 2
        %v605 = vadd.f32 %v603, %v604
        %v606 = vrot.slane %v605, 1
        %v607 = vadd.f32 %v605, %v606
        %v608 = vmax.f32 %v569, 1e-24
        %v609 = vmax.f32 %v588, 1e-24
        %v610 = vrsqrt.pop %v608
        %v611 = vrsqrt.pop %v609
        %v612 = vrcp.pop %v608
        %v613 = vmul.f32 %v569, %v612
        %v614 = vrcp.pop %v609
        %v615 = vmul.f32 %v588, %v614
        %v616 = vadd.f32 %v613, %v615
        %v617 = vmul.f32 %v607, 2.0
        %v618 = vmul.f32 %v610, %v611
        %v619 = vmul.f32 %v617, %v618
        %v620 = vsub.f32 %v616, %v619
        %v621 = vadd.f32 %v620, 0.0
        %s622 = vtos %v621
        %v623 = vstv %s622
        %624 = vst [vmem:[%s201] sm:$0xff] %v623
        %s625 = sand.u32 %s82, 1
        %s626 = scalar_lea.sflag [#allocation4], %s625
        %s627 = sand.u32 %s82, 1
        %s628 = smul.addr %s627, 8
        %s629 = scalar_lea.vmem [#allocation7], %s628
        // Predicated region
        $region37: #{tpu_custom_call.1} parent=27 // pred_check
          %p630 = pneg %p92
        $region38: #{tpu_custom_call.1} parent=27 // pred_check_branch
          %632 = sbr.rel (%p630) target = $region40
        $region39: #{tpu_custom_call.1} parent=27 // pred_region
          %s634 = ssub.s32 128, 128
          %635 = vsyncadd %s626, %s634
          %s636 = smul.addr %s22, 128
          %s637 = scalar_lea.hbm %s2, %s636
          %s639 = sshll.u32 %s629, 4
          %s640 = int_to_ptr.vmem [resolvable:$true] %s639
          %642 = dma.vmem_to_hbm [thread:$0]  %s640, 128, %s637, %s626
        $region40: #{tpu_custom_call.1} parent=27 // pred_fallthru
          _
      $region28: #{tpu_custom_call.1} parent=5 // pred_fallthru
        _
      %p643 = scmp.le.s32.totalorder 2, %s17
      // Predicated region
      $region41: #{tpu_custom_call.1} parent=5 // pred_check
        %p644 = pneg %p643
      $region42: #{tpu_custom_call.1} parent=5 // pred_check_branch
        %646 = sbr.rel (%p644) target = $region44
      $region43: #{tpu_custom_call.1} parent=5 // pred_region
        %s647 = ssub.s32 %s17, 2
        // Predicated region
        $region45: #{tpu_custom_call.1} parent=43 // pred_check
          %p648 = pneg %p98
        $region46: #{tpu_custom_call.1} parent=43 // pred_check_branch
          %650 = sbr.rel (%p648) target = $region48
        $region47: #{tpu_custom_call.1} parent=43 // pred_region
          %s651 = sand.u32 %s83, 1
          %s652 = scalar_lea.sflag [#allocation4], %s651
          %s653 = sand.u32 %s83, 1
          %s654 = smul.addr %s653, 8
          %s655 = scalar_lea.vmem [#allocation7], %s654
          %656 = dma.done %s652, 128
        $region48: #{tpu_custom_call.1} parent=43 // pred_fallthru
          _
      $region44: #{tpu_custom_call.1} parent=5 // pred_fallthru
        _
    $region6: #{tpu_custom_call.1} parent=1 // loop_footer
      %s21 = sadd.s32 1, %s17
    $region7: #{tpu_custom_call.1} parent=1 // loop_footer_branch
      %16 = sbr.rel target = $region3
    $region8: #{tpu_custom_call.1} parent=1 // loop_exit
      _
    %657 = vsyncpa [#allocation3], 1
    %s658 = scalar_lea.sflag [#allocation3], 1
    %659 = vsyncpa %s658, 1
    %660 = vsyncpa [#allocation6], 1
    %s661 = scalar_lea.sflag [#allocation6], 1
    %662 = vsyncpa %s661, 1
    %663 = vsyncpa [#allocation4], 1
    %s664 = scalar_lea.sflag [#allocation4], 1
    %665 = vsyncpa %s664, 1

</llo_original>
